<compile_context>
chip_gen: v6e
topology: v6e:2x2x1
jax: 0.10.0
libtpu: 0.0.40
codegen_flags: <defaults>
</compile_context>

<pallas_src>
import math
import functools

import jax
import jax.numpy as jnp
from jax.experimental import pallas as pl
from jax.experimental.pallas import tpu as pltpu


# ----------------------------- linear kernel -------------------------------

def _linear_kernel(x_ref, w_ref, b_ref, o_ref, acc_ref):
    # x: (tm, tk), w: (tk, tn), b: (1, tn) -> o: (tm, tn); fp32 accumulator.
    kk = pl.program_id(2)

    @pl.when(kk == 0)
    def _():
        acc_ref[...] = jnp.zeros_like(acc_ref)

    acc_ref[...] += jnp.dot(
        x_ref[...], w_ref[...], preferred_element_type=jnp.float32
    )

    @pl.when(kk == pl.num_programs(2) - 1)
    def _():
        o_ref[...] = (acc_ref[...] + b_ref[...].astype(jnp.float32)).astype(o_ref.dtype)


def _pick_tile(dim, candidates):
    for t in candidates:
        if dim >= t and dim % t == 0:
            return t
    return dim  # fall back to the full dimension (always legal as a block)


def _pallas_linear(x2d, w, b):
    M, K = x2d.shape
    N = w.shape[1]
    # MXU-friendly tiles (256-multiples on M/N feed the 2x256x256 MXU on
    # v6e/v7x); fall back to full dims for small/toy shapes.  With fp32 and
    # tm=256, tn=512, tk=512 the double-buffered working set is ~4.5 MiB,
    # comfortably inside v7x's 64 MiB physical VMEM.
    tm = _pick_tile(M, (256, 128, 64, 32, 16, 8))
    tn = _pick_tile(N, (512, 256, 128))
    tk = _pick_tile(K, (512, 256, 128))
    grid = (M // tm, N // tn, K // tk)

    return pl.pallas_call(
        _linear_kernel,
        out_shape=jax.ShapeDtypeStruct((M, N), x2d.dtype),
        grid=grid,
        in_specs=[
            pl.BlockSpec((tm, tk), lambda i, j, kk: (i, kk)),
            pl.BlockSpec((tk, tn), lambda i, j, kk: (kk, j)),
            pl.BlockSpec((1, tn), lambda i, j, kk: (0, j)),
        ],
        out_specs=pl.BlockSpec((tm, tn), lambda i, j, kk: (i, j)),
        scratch_shapes=[pltpu.VMEM((tm, tn), jnp.float32)],
        compiler_params=pltpu.CompilerParams(
            dimension_semantics=("parallel", "parallel", "arbitrary"),
            # Above the 16-32 MiB scoped defaults, below v7x's 64 MiB physical.
            vmem_limit_bytes=48 * 1024 * 1024,
        ),
    )(x2d, w, b)


# --------------------------- attention kernels ------------------------------

def _attn_core(q_full, k_full, v_full, ctx_ref, attn_ref, head_num, head_dim,
               inv_scale):
    # q_full/k_full/v_full: (S, D) slabs for one batch, un-transposed layout.
    # Loop over heads inside the kernel (static unroll): per head,
    # scores = (q*inv_scale) @ k^T ; softmax ; ctx = p @ v.
    for h in range(head_num):
        lo = h * head_dim
        hi = lo + head_dim
        qh = q_full[:, lo:hi] * inv_scale          # scale folded into Q
        kh = k_full[:, lo:hi]
        vh = v_full[:, lo:hi]
        scores = jax.lax.dot_general(
            qh, kh, (((1,), (1,)), ((), ())), preferred_element_type=jnp.float32
        )
        m = jnp.max(scores, axis=-1, keepdims=True)
        e = jnp.exp(scores - m)
        p = e * pl.reciprocal(jnp.sum(e, axis=-1, keepdims=True), approx=True)
        if attn_ref is not None:
            attn_ref[h, :, :] = p.astype(attn_ref.dtype)
        # dropout: eval-mode identity
        ctx = jnp.dot(p.astype(vh.dtype), vh, preferred_element_type=jnp.float32)
        ctx_ref[h, :, :] = ctx.astype(ctx_ref.dtype)


def _attention_kernel_packed(qkv_ref, ctx_ref, *maybe_attn, head_num, head_dim,
                             inv_scale):
    # qkv_ref: (S, 3D) block (fused self-attention projection).
    D = head_num * head_dim
    qkv = qkv_ref[...]
    attn_ref = maybe_attn[0] if maybe_attn else None
    _attn_core(qkv[:, 0:D], qkv[:, D:2 * D], qkv[:, 2 * D:3 * D],
               ctx_ref, attn_ref, head_num, head_dim, inv_scale)


def _attention_kernel_split(q_ref, k_ref, v_ref, ctx_ref, *maybe_attn,
                            head_num, head_dim, inv_scale):
    # q/k/v refs: (S, D) blocks each (cross-attention path).
    attn_ref = maybe_attn[0] if maybe_attn else None
    _attn_core(q_ref[...], k_ref[...], v_ref[...],
               ctx_ref, attn_ref, head_num, head_dim, inv_scale)


def _pallas_attention(attn_inputs, in_specs, kernel, B, S, D, head_num, dtype,
                      return_attention):
    head_dim = D // head_num
    ctx_shape = jax.ShapeDtypeStruct((B, head_num, S, head_dim), dtype)
    ctx_spec = pl.BlockSpec((None, head_num, S, head_dim), lambda b: (b, 0, 0, 0))
    cparams = pltpu.CompilerParams(
        dimension_semantics=("parallel",),
        vmem_limit_bytes=48 * 1024 * 1024,
    )
    if return_attention:
        ctx, attn = pl.pallas_call(
            kernel,
            out_shape=(
                ctx_shape,
                jax.ShapeDtypeStruct((B, head_num, S, S), dtype),
            ),
            grid=(B,),
            in_specs=in_specs,
            out_specs=(
                ctx_spec,
                pl.BlockSpec((None, head_num, S, S), lambda b: (b, 0, 0, 0)),
            ),
            compiler_params=cparams,
        )(*attn_inputs)
        return ctx, attn

    ctx = pl.pallas_call(
        kernel,
        out_shape=ctx_shape,
        grid=(B,),
        in_specs=in_specs,
        out_specs=ctx_spec,
        compiler_params=cparams,
    )(*attn_inputs)
    return ctx, None


# ------------------------------ full forward --------------------------------

def multi_headed_attention(q, k, v, params, head_num, return_attention=True):
    """Forward pass of MultiHeadedAttention (mask=None, eval mode)."""
    B, S, D = q.shape
    hd = D // head_num
    inv_scale = 1.0 / math.sqrt(hd)

    if (q is k) and (k is v):
        # Self-attention: fused QKV projection (one pass over activations).
        w_qkv = jnp.concatenate([params["wq"], params["wk"], params["wv"]], axis=1)
        b_qkv = jnp.concatenate([params["bq"], params["bk"], params["bv"]], axis=1)
        qkv = _pallas_linear(q.reshape(B * S, D), w_qkv, b_qkv).reshape(B, S, 3 * D)
        kernel = functools.partial(_attention_kernel_packed, head_num=head_num,
                                   head_dim=hd, inv_scale=inv_scale)
        attn_inputs = (qkv,)
        in_specs = [pl.BlockSpec((None, S, 3 * D), lambda b: (b, 0, 0))]
        dtype = qkv.dtype
    else:
        # Cross-attention: three tiled projections; stay in (B, S, D) layout
        # (no wrapper-side head transposes -- heads sliced inside the kernel).
        qp = _pallas_linear(q.reshape(B * S, D), params["wq"], params["bq"]).reshape(B, S, D)
        kp = _pallas_linear(k.reshape(B * S, D), params["wk"], params["bk"]).reshape(B, S, D)
        vp = _pallas_linear(v.reshape(B * S, D), params["wv"], params["bv"]).reshape(B, S, D)
        kernel = functools.partial(_attention_kernel_split, head_num=head_num,
                                   head_dim=hd, inv_scale=inv_scale)
        attn_inputs = (qp, kp, vp)
        spec = pl.BlockSpec((None, S, D), lambda b: (b, 0, 0))
        in_specs = [spec, spec, spec]
        dtype = qp.dtype

    ctx, attn = _pallas_attention(attn_inputs, in_specs, kernel, B, S, D,
                                  head_num, dtype, return_attention)

    # PyTorch: ctx.contiguous().view(B, -1, hidden) on the (B, H, S, hd) tensor
    # WITHOUT un-permuting heads -- a free row-major reshape (no data movement).
    attention_seq = ctx.reshape(B, -1, D)

    out = _pallas_linear(attention_seq.reshape(-1, D), params["wo"], params["bo"])
    return out.reshape(B, -1, D), attn


# --------------------------- pure-JAX reference ----------------------------

def _reference(q, k, v, params, head_num):
    B, S, D = q.shape
    hd = D // head_num
    scale = math.sqrt(hd)
    query = q.reshape(B * S, D) @ params["wq"] + params["bq"]
    key = k.reshape(B * S, D) @ params["wk"] + params["bk"]
    value = v.reshape(B * S, D) @ params["wv"] + params["bv"]
    query = query.reshape(B, S, head_num, hd).transpose(0, 2, 1, 3)
    key = key.reshape(B, S, head_num, hd).transpose(0, 2, 1, 3)
    value = value.reshape(B, S, head_num, hd).transpose(0, 2, 1, 3)
    scores = jnp.einsum("bhqd,bhkd->bhqk", query, key) / scale
    attn = jax.nn.softmax(scores, axis=-1)
    ctx = jnp.einsum("bhqk,bhkd->bhqd", attn, value)
    seq = ctx.reshape(B, -1, D)
    out = seq.reshape(-1, D) @ params["wo"] + params["bo"]
    return out.reshape(B, -1, D), attn


# --------------------------------- main -------------------------------------

if __name__ == "__main__":
    B, S, D, H = 2, 8, 32, 4  # batch, seq, hidden_dim, head_num

    key0 = jax.random.PRNGKey(0)
    keys = jax.random.split(key0, 11)

    def init_linear(kw, kb, fan_in, fan_out):
        # mimic nn.Linear default init; weight stored as (in, out) = W.T
        bound = 1.0 / math.sqrt(fan_in)
        w = jax.random.uniform(kw, (fan_in, fan_out), jnp.float32, -bound, bound)
        b = jax.random.uniform(kb, (1, fan_out), jnp.float32, -bound, bound)
        return w, b

    wq, bq = init_linear(keys[0], keys[1], D, D)
    wk, bk = init_linear(keys[2], keys[3], D, D)
    wv, bv = init_linear(keys[4], keys[5], D, D)
    wo, bo = init_linear(keys[6], keys[7], D, D)
    params = dict(wq=wq, bq=bq, wk=wk, bk=bk, wv=wv, bv=bv, wo=wo, bo=bo)

    q = jax.random.normal(keys[8], (B, S, D), jnp.float32)
    k = jax.random.normal(keys[9], (B, S, D), jnp.float32)
    v = jax.random.normal(keys[10], (B, S, D), jnp.float32)

    # Cross-attention path (distinct q/k/v): three tiled projection kernels.
    out, attn = multi_headed_attention(q, k, v, params, H)
    out, attn = jax.block_until_ready((out, attn))
    out_ref, attn_ref = _reference(q, k, v, params, H)
    assert out.shape == (B, S, D) and attn.shape == (B, H, S, S)
    assert jnp.allclose(out, out_ref, atol=2e-3, rtol=2e-3)
    assert jnp.allclose(attn, attn_ref, atol=2e-3, rtol=2e-3)

    # Self-attention path (q is k is v): fused QKV projection kernel.
    out_s, attn_s = multi_headed_attention(q, q, q, params, H)
    out_s, attn_s = jax.block_until_ready((out_s, attn_s))
    out_ref_s, attn_ref_s = _reference(q, q, q, params, H)
    assert jnp.allclose(out_s, out_ref_s, atol=2e-3, rtol=2e-3)
    assert jnp.allclose(attn_s, attn_ref_s, atol=2e-3, rtol=2e-3)

    print("KERNEL_OK")
</pallas_src>

<mosaic_0001>
module attributes {stable_mosaic.version = 11 : i64} {
  func.func @_linear_kernel(%arg0: i32, %arg1: i32, %arg2: i32, %arg3: memref<16x32xf32, #tpu.memory_space<vmem>>, %arg4: memref<32x32xf32, #tpu.memory_space<vmem>>, %arg5: memref<1x32xf32, #tpu.memory_space<vmem>>, %arg6: memref<16x32xf32, #tpu.memory_space<vmem>>, %arg7: memref<16x32xf32, #tpu.memory_space<vmem>>) attributes {dimension_semantics = [#tpu.dimension_semantics<parallel>, #tpu.dimension_semantics<parallel>, #tpu.dimension_semantics<arbitrary>], iteration_bounds = array<i64: 1, 1, 1>, scalar_prefetch = 0 : i64, scratch_operands = 1 : i64, tpu.core_type = #tpu.core_type<tc>, window_params = [{transform_indices = @transform_0, window_bounds = array<i64: 16, 32>}, {transform_indices = @transform_1, window_bounds = array<i64: 32, 32>}, {transform_indices = @transform_2, window_bounds = array<i64: 1, 32>}, {transform_indices = @transform_3, window_bounds = array<i64: 16, 32>}]} {
    %c0_i32 = arith.constant 0 : i32
    %0 = arith.cmpi eq, %arg2, %c0_i32 : i32
    %1 = arith.extui %0 : i1 to i32
    %c0_i32_0 = arith.constant 0 : i32
    %2 = arith.cmpi ne, %1, %c0_i32_0 : i32
    scf.if %2 {
      %cst_10 = arith.constant 0.000000e+00 : f32
      %12 = vector.broadcast %cst_10 : f32 to vector<16x32xf32>
      %c0_11 = arith.constant 0 : index
      %c0_12 = arith.constant 0 : index
      %13 = vector.load %arg7[%c0_11, %c0_12] : memref<16x32xf32, #tpu.memory_space<vmem>>, vector<16x32xf32>
      tpu.vector_store %arg7[%c0_11, %c0_12], %12 {strides = array<i32>} : memref<16x32xf32, #tpu.memory_space<vmem>>, vector<16x32xf32>,
    } else {
    }
    %c0 = arith.constant 0 : index
    %c0_1 = arith.constant 0 : index
    %3 = vector.load %arg7[%c0, %c0_1] : memref<16x32xf32, #tpu.memory_space<vmem>>, vector<16x32xf32>
    %c0_2 = arith.constant 0 : index
    %c0_3 = arith.constant 0 : index
    %4 = vector.load %arg3[%c0_2, %c0_3] : memref<16x32xf32, #tpu.memory_space<vmem>>, vector<16x32xf32>
    %c0_4 = arith.constant 0 : index
    %c0_5 = arith.constant 0 : index
    %5 = vector.load %arg4[%c0_4, %c0_5] : memref<32x32xf32, #tpu.memory_space<vmem>>, vector<32x32xf32>
    %cst = arith.constant dense<0.000000e+00> : vector<16x32xf32>
    %6 = tpu.matmul %4, %5, %cst {dimension_numbers = #tpu.dot_dimension_numbers<[1], [0], [0], [1], [0, 0, 1, 1], [], []>} : vector<16x32xf32>, vector<32x32xf32>, vector<16x32xf32> -> vector<16x32xf32>
    %7 = arith.addf %3, %6 : vector<16x32xf32>
    %c0_6 = arith.constant 0 : index
    %c0_7 = arith.constant 0 : index
    %8 = vector.load %arg7[%c0_6, %c0_7] : memref<16x32xf32, #tpu.memory_space<vmem>>, vector<16x32xf32>
    tpu.vector_store %arg7[%c0_6, %c0_7], %7 {strides = array<i32>} : memref<16x32xf32, #tpu.memory_space<vmem>>, vector<16x32xf32>,
    %c0_i32_8 = arith.constant 0 : i32
    %9 = arith.cmpi eq, %arg2, %c0_i32_8 : i32
    %10 = arith.extui %9 : i1 to i32
    %c0_i32_9 = arith.constant 0 : i32
    %11 = arith.cmpi ne, %10, %c0_i32_9 : i32
    scf.if %11 {
      %c0_10 = arith.constant 0 : index
      %c0_11 = arith.constant 0 : index
      %12 = vector.load %arg7[%c0_10, %c0_11] : memref<16x32xf32, #tpu.memory_space<vmem>>, vector<16x32xf32>
      %c0_12 = arith.constant 0 : index
      %c0_13 = arith.constant 0 : index
      %13 = vector.load %arg5[%c0_12, %c0_13] : memref<1x32xf32, #tpu.memory_space<vmem>>, vector<1x32xf32>
      %14 = vector.broadcast %13 : vector<1x32xf32> to vector<16x32xf32>
      %15 = arith.addf %12, %14 : vector<16x32xf32>
      %c0_14 = arith.constant 0 : index
      %c0_15 = arith.constant 0 : index
      %16 = vector.load %arg6[%c0_14, %c0_15] : memref<16x32xf32, #tpu.memory_space<vmem>>, vector<16x32xf32>
      tpu.vector_store %arg6[%c0_14, %c0_15], %15 {strides = array<i32>} : memref<16x32xf32, #tpu.memory_space<vmem>>, vector<16x32xf32>,
    } else {
    }
    return
  }
  func.func @transform_0(%arg0: i32, %arg1: i32, %arg2: i32) -> (i32, i32) {
    %c0_i32 = arith.constant 0 : i32
    return %arg0, %arg2 : i32, i32
  }
  func.func @transform_1(%arg0: i32, %arg1: i32, %arg2: i32) -> (i32, i32) {
    %c0_i32 = arith.constant 0 : i32
    return %arg2, %arg1 : i32, i32
  }
  func.func @transform_2(%arg0: i32, %arg1: i32, %arg2: i32) -> (i32, i32) {
    %c0_i32 = arith.constant 0 : i32
    %c0_i32_0 = arith.constant 0 : i32
    return %c0_i32, %arg1 : i32, i32
  }
  func.func @transform_3(%arg0: i32, %arg1: i32, %arg2: i32) -> (i32, i32) {
    %c0_i32 = arith.constant 0 : i32
    return %arg0, %arg1 : i32, i32
  }
}

</mosaic_0001>

<llo_original>
// kernel: tpu_custom_call.1
$region0: #{tpu_custom_call.1}
  #allocation0 [shape = 'u32[]', space=smem, size = 0x4, offset = 0x4, fixed_abs, tag = 'smem constant byte address 0x4 - core index']
  #allocation1 [shape = 'u32[144,128]{1,0:T(1,128)}', space=vmem, size = 0x12000, scoped, tag = 'internal scratch']
  #allocation2 [shape = 'f32[16,32]{1,0:T(8,128)}', space=vmem, size = 0x2000, scoped, tag = 'scratch operand']
  %s0 = inlined_call_operand.hbm [shape: f32[16,32], index: 0, kind: input, shape index: {}]
  %s1 = inlined_call_operand.hbm [shape: f32[32,32], index: 1, kind: input, shape index: {}]
  %s2 = inlined_call_operand.vmem [shape: f32[1,32], index: 2, kind: input, shape index: {}]
  %s3 = inlined_call_operand.hbm [shape: f32[16,32], index: 3, kind: output, shape index: {}]
  %s4 = sld [smem:[#allocation0]]
  $region38: #{tpu_custom_call.1} parent=0
    _
  %s6 = ssub.s32 1, %s4
  %s7 = scalar_select 0, %s6, %s4
  $region1: #{tpu_custom_call.1} parent=0
    #allocation3 [shape = 'u8[8192]{0}', space=vmem, size = 0x2000, scoped, tag = 'input window, operand 0, single buffered']
    #allocation4 [shape = 's32[1]{0}', space=sflag, size = 0x4, scoped, tag = 'scoped memory for tpu_custom_call.1']
    #allocation5 [shape = 's32[1]{0}', space=sflag, size = 0x4, scoped, tag = 'scoped memory for tpu_custom_call.1']
    #allocation6 [shape = 'u8[16384]{0}', space=vmem, size = 0x4000, scoped, tag = 'input window, operand 1, single buffered']
    #allocation7 [shape = 's32[1]{0}', space=sflag, size = 0x4, scoped, tag = 'scoped memory for tpu_custom_call.1']
    #allocation8 [shape = 'u8[8192]{0}', space=vmem, size = 0x2000, scoped, tag = 'output window, operand 0, single buffered']
    %8 = vsyncpa [#allocation4], 0
    %9 = vsyncpa [#allocation7], 0
    %10 = vsyncpa [#allocation5], 0
    // Predicated region
    $region2: #{tpu_custom_call.1} parent=1 // pred_check
      _
    $region3: #{tpu_custom_call.1} parent=1 // pred_check_branch
      %12 = sbr.rel (0) target = $region5
    $region4: #{tpu_custom_call.1} parent=1 // pred_region
      %s14 = ssub.s32 256, 256
      %15 = vsyncadd [#allocation4], %s14
      %s16 = sshll.u32 [#allocation3], 4
      %s17 = int_to_ptr.vmem [resolvable:$true] %s16
      %22 = dma.hbm_to_vmem [thread:$0]  %s0, 256, %s17, [#allocation4], 128, 128, 8
    $region5: #{tpu_custom_call.1} parent=1 // pred_fallthru
      _
    // Predicated region
    $region6: #{tpu_custom_call.1} parent=1 // pred_check
      _
    $region7: #{tpu_custom_call.1} parent=1 // pred_check_branch
      %24 = sbr.rel (0) target = $region9
    $region8: #{tpu_custom_call.1} parent=1 // pred_region
      %s26 = ssub.s32 512, 512
      %27 = vsyncadd [#allocation7], %s26
      %s28 = sshll.u32 [#allocation6], 4
      %s29 = int_to_ptr.vmem [resolvable:$true] %s28
      %34 = dma.hbm_to_vmem [thread:$0]  %s1, 512, %s29, [#allocation7], 128, 128, 8
    $region9: #{tpu_custom_call.1} parent=1 // pred_fallthru
      _
    // Predicated region
    $region10: #{tpu_custom_call.1} parent=1 // pred_check
      _
    $region11: #{tpu_custom_call.1} parent=1 // pred_check_branch
      %36 = sbr.rel (0) target = $region13
    $region12: #{tpu_custom_call.1} parent=1 // pred_region
      _
    $region13: #{tpu_custom_call.1} parent=1 // pred_fallthru
      _
    // Predicated region
    $region14: #{tpu_custom_call.1} parent=1 // pred_check
      _
    $region15: #{tpu_custom_call.1} parent=1 // pred_check_branch
      %38 = sbr.rel (0) target = $region17
    $region16: #{tpu_custom_call.1} parent=1 // pred_region
      %39 = dma.done [#allocation4], 256
    $region17: #{tpu_custom_call.1} parent=1 // pred_fallthru
      _
    // Predicated region
    $region18: #{tpu_custom_call.1} parent=1 // pred_check
      _
    $region19: #{tpu_custom_call.1} parent=1 // pred_check_branch
      %41 = sbr.rel (0) target = $region21
    $region20: #{tpu_custom_call.1} parent=1 // pred_region
      %42 = dma.done [#allocation7], 512
    $region21: #{tpu_custom_call.1} parent=1 // pred_fallthru
      _
    %p43 = scmp.eq.s32.totalorder 0, 0
    // Predicated region
    $region22: #{tpu_custom_call.1} parent=1 // pred_check
      %p44 = pneg %p43
    $region23: #{tpu_custom_call.1} parent=1 // pred_check_branch
      %46 = sbr.rel (%p44) target = $region25
    $region24: #{tpu_custom_call.1} parent=1 // pred_region
      %vm47 = vcmask 261120
      %48 = vst.msk [vmem:[#allocation2] sm:$0xff] %vm47, 0.0
      %49 = vst.msk [vmem:[#allocation2 + $0x8] sm:$0xff] %vm47, 0.0
    $region25: #{tpu_custom_call.1} parent=1 // pred_fallthru
      _
    %v50 = vld [vmem:[#allocation2] sm:$0xff]
    %v51 = vld [vmem:[#allocation2 + $0x8] sm:$0xff]
    %v52 = vld [vmem:[#allocation3] sm:$0xff]
    %v53 = vld [vmem:[#allocation3 + $0x8] sm:$0xff]
    %v54 = vld [vmem:[#allocation6] sm:$0xff]
    %v55 = vld [vmem:[#allocation6 + $0x8] sm:$0xff]
    %v56 = vld [vmem:[#allocation6 + $0x10] sm:$0xff]
    %v57 = vld [vmem:[#allocation6 + $0x18] sm:$0xff]
    %vm58 = vcmask 261120
    %v60 = vsel %vm58, %v52, 0
    %v63 = vsel %vm58, %v53, 0
    %65 = vmatprep.subr.mxu0 0.0
    %66 = vmatpush1.msra.mxu0 0.0
    %67 = vmatprep.subr.mxu0 0.0
    %68 = vmatpush1.msra.mxu0 0.0
    %69 = vmatprep.subr.mxu0 0.0
    %70 = vmatpush1.msra.mxu0 0.0
    %71 = vmatprep.subr.mxu0 0.0
    %72 = vmatpush1.msra.mxu0 0.0
    %73 = vmatprep.subr.mxu0 0.0
    %74 = vmatpush1.msra.mxu0 0.0
    %75 = vmatprep.subr.mxu0 0.0
    %76 = vmatpush1.msra.mxu0 0.0
    %77 = vmatprep.subr.mxu0 0.0
    %78 = vmatpush1.msra.mxu0 0.0
    %79 = vmatprep.subr.mxu0 0.0
    %80 = vmatpush1.msra.mxu0 0.0
    %81 = vmatprep.subr.mxu0 0.0
    %82 = vmatpush1.msra.mxu0 0.0
    %83 = vmatprep.subr.mxu0 0.0
    %84 = vmatpush1.msra.mxu0 0.0
    %85 = vmatprep.subr.mxu0 0.0
    %86 = vmatpush1.msra.mxu0 0.0
    %87 = vmatprep.subr.mxu0 0.0
    %88 = vmatpush1.msra.mxu0 0.0
    %89 = vmatprep.subr.mxu0 0.0
    %90 = vmatpush1.msra.mxu0 %v57
    %91 = vmatprep.subr.mxu0 0.0
    %92 = vmatpush1.msra.mxu0 %v56
    %93 = vmatprep.subr.mxu0 0.0
    %94 = vmatpush1.msra.mxu0 %v55
    %95 = vmatprep.subr.mxu0 0.0
    %96 = vmatpush1.msra.mxu0 %v54
    %97 = vmatprep.subr.mxu0 0.0
    %98 = vmatpush2.msra.mxu0 0.0
    %99 = vmatprep.subr.mxu0 0.0
    %100 = vmatpush2.msra.mxu0 0.0
    %101 = vmatprep.subr.mxu0 0.0
    %102 = vmatpush2.msra.mxu0 0.0
    %103 = vmatprep.subr.mxu0 0.0
    %104 = vmatpush2.msra.mxu0 0.0
    %105 = vmatprep.subr.mxu0 0.0
    %106 = vmatpush2.msra.mxu0 0.0
    %107 = vmatprep.subr.mxu0 0.0
    %108 = vmatpush2.msra.mxu0 0.0
    %109 = vmatprep.subr.mxu0 0.0
    %110 = vmatpush2.msra.mxu0 0.0
    %111 = vmatprep.subr.mxu0 0.0
    %112 = vmatpush2.msra.mxu0 0.0
    %113 = vmatprep.subr.mxu0 0.0
    %114 = vmatpush2.msra.mxu0 0.0
    %115 = vmatprep.subr.mxu0 0.0
    %116 = vmatpush2.msra.mxu0 0.0
    %117 = vmatprep.subr.mxu0 0.0
    %118 = vmatpush2.msra.mxu0 0.0
    %119 = vmatprep.subr.mxu0 0.0
    %120 = vmatpush2.msra.mxu0 0.0
    %121 = vmatprep.subr.mxu0 0.0
    %122 = vmatpush2.msra.mxu0 0.0
    %123 = vmatprep.subr.mxu0 0.0
    %124 = vmatpush2.msra.mxu0 0.0
    %125 = vmatprep.subr.mxu0 0.0
    %126 = vmatpush2.msra.mxu0 0.0
    %127 = vmatprep.subr.mxu0 0.0
    %128 = vmatpush2.msra.mxu0 0.0
    %129 = vmatprep.mubr.f32.mxu0 0.0
    %130 = vmatmul.mubr.f32.gmra.mxu0 %v60
    %v131 = vpop.f32.mrf.mxu0
    %v132 = vadd.f32 0.0, %v131
    %v133 = vpop.f32.mrf.mxu0
    %134 = vmatprep.mubr.f32.mxu0 0.0
    %135 = vmatmul.mubr.f32.gmra.mxu0 %v63
    %v136 = vpop.f32.mrf.mxu0
    %v137 = vadd.f32 0.0, %v136
    %v138 = vpop.f32.mrf.mxu0
    %139 = vdwg.mxu0
    %v140 = vadd.f32 %v50, %v132
    %v141 = vadd.f32 %v51, %v137
    %142 = vst.msk [vmem:[#allocation2] sm:$0xff] %vm58, %v140
    %143 = vst.msk [vmem:[#allocation2 + $0x8] sm:$0xff] %vm58, %v141
    // Predicated region
    $region26: #{tpu_custom_call.1} parent=1 // pred_check
      %p144 = pneg %p43
    $region27: #{tpu_custom_call.1} parent=1 // pred_check_branch
      %146 = sbr.rel (%p144) target = $region29
    $region28: #{tpu_custom_call.1} parent=1 // pred_region
      %v147 = vld [vmem:[#allocation2] sm:$0xff]
      %v148 = vld [vmem:[#allocation2 + $0x8] sm:$0xff]
      %v149 = vld [vmem:[%s2] sm:$0x1]
      %v151 = vlaneseq
      %v152 = vshrl.u32 %v151, 7
      %v153 = vsub.s32 0, %v152
      %v154 = vrot.slane %v149, %v153
      %v156 = vadd.f32 %v147, %v154
      %v157 = vadd.f32 %v148, %v154
      %158 = vst.msk [vmem:[#allocation8] sm:$0xff] %vm58, %v156
      %159 = vst.msk [vmem:[#allocation8 + $0x8] sm:$0xff] %vm58, %v157
    $region29: #{tpu_custom_call.1} parent=1 // pred_fallthru
      _
    // Predicated region
    $region30: #{tpu_custom_call.1} parent=1 // pred_check
      _
    $region31: #{tpu_custom_call.1} parent=1 // pred_check_branch
      %161 = sbr.rel (0) target = $region33
    $region32: #{tpu_custom_call.1} parent=1 // pred_region
      %s163 = ssub.s32 256, 256
      %164 = vsyncadd [#allocation5], %s163
      %s165 = sshll.u32 [#allocation8], 4
      %s166 = int_to_ptr.vmem [resolvable:$true] %s165
      %171 = dma.vmem_to_hbm [thread:$0]  %s166, 256, %s3, [#allocation5], 128, 128, 8
    $region33: #{tpu_custom_call.1} parent=1 // pred_fallthru
      _
    // Predicated region
    $region34: #{tpu_custom_call.1} parent=1 // pred_check
      _
    $region35: #{tpu_custom_call.1} parent=1 // pred_check_branch
      %173 = sbr.rel (0) target = $region37
    $region36: #{tpu_custom_call.1} parent=1 // pred_region
      %174 = dma.done [#allocation5], 256
    $region37: #{tpu_custom_call.1} parent=1 // pred_fallthru
      _
    %175 = vsyncpa [#allocation4], 1
    %176 = vsyncpa [#allocation7], 1
    %177 = vsyncpa [#allocation5], 1

</llo_original>
